<compile_context>
chip_gen: v6e
topology: v6e:2x2x1
jax: 0.10.0
libtpu: 0.0.40
codegen_flags: <defaults>
</compile_context>

<pallas_src>
import functools

import jax
import jax.numpy as jnp
from jax.experimental import pallas as pl
from jax.experimental.pallas import tpu as pltpu


# ----------------------------------------------------------------------------
# Kernel 1: tiled matmul  out = A @ B   (A: bf16 adjacency tile, B: f32 emb)
# ----------------------------------------------------------------------------
def _matmul_kernel(a_ref, b_ref, o_ref, *, tk):
    k = pl.program_id(1)
    nk = pl.num_programs(1)

    @pl.when(k == 0)
    def _init():
        o_ref[...] = jnp.zeros_like(o_ref)

    # bf16 adjacency tile streamed from HBM; upcast and accumulate in f32
    # directly in the resident output block (output dtype is f32).
    a = a_ref[...].astype(jnp.float32)                        # (tm, tk)
    start = pl.multiple_of(k * tk, tk)
    b = b_ref[pl.ds(start, tk), :]                            # (tk, D) slice of resident B
    o_ref[...] += jnp.dot(a, b, preferred_element_type=jnp.float32)


def _pick_tile(dim, candidates=(512, 256, 128)):
    # Prefer big, 128-multiple tiles (MXU / pipeline friendly); fall back to
    # the full dimension for small graphs (full-extent block is always legal).
    for c in candidates:
        if dim % c == 0:
            return c
    return dim


def tiled_matmul(a_bf16, b_f32, *, tm=None, tk=None):
    """out[M, D] = a_bf16[M, K] @ b_f32[K, D], f32 accumulation."""
    m, k_dim = a_bf16.shape
    k2, d = b_f32.shape
    assert k_dim == k2
    tm = tm or _pick_tile(m)
    tk = tk or _pick_tile(k_dim)
    grid = (m // tm, k_dim // tk)

    kernel = functools.partial(_matmul_kernel, tk=tk)
    return pl.pallas_call(
        kernel,
        out_shape=jax.ShapeDtypeStruct((m, d), jnp.float32),
        grid_spec=pltpu.PrefetchScalarGridSpec(
            num_scalar_prefetch=0,
            grid=grid,
            in_specs=[
                # adjacency: streamed (tm, tk) tiles, double-buffered by Pallas
                pl.BlockSpec((tm, tk), lambda i, k: (i, k)),
                # embeddings: full (K, D) kept VMEM-resident (constant block
                # index -> fetched once); sliced in-kernel with pl.ds.
                # TODO(synk): for item/user tables too large for VMEM, switch
                # this to streamed (tk, D) tiles with index_map (k, 0).
                pl.BlockSpec((k_dim, d), lambda i, k: (0, 0)),
            ],
            out_specs=pl.BlockSpec((tm, d), lambda i, k: (i, 0)),
        ),
        compiler_params=pltpu.CompilerParams(
            # row tiles shard across the 2 TCs on v7x; k is the reduction.
            dimension_semantics=("parallel", "arbitrary"),
            vmem_limit_bytes=32 * 1024 * 1024,  # safe budget on v5e/v6e/v7x
        ),
    )(a_bf16, b_f32)


# ----------------------------------------------------------------------------
# Graph propagation (compute_embeddings) using the bipartite structure.
# ----------------------------------------------------------------------------
def lightgcn_propagate(r_bf16, rt_bf16, user_emb, item_emb, n_layers):
    # A @ E = concat(R @ E_items, R^T @ E_users); zero diagonal blocks skipped.
    # TODO(synk): true block-sparse streaming (scalar-prefetched lists of
    # nonzero adjacency column blocks) is not implemented; R is treated dense.
    u_cur, i_cur = user_emb, item_emb
    u_acc, i_acc = user_emb, item_emb           # running sum over layer outputs
    for _ in range(n_layers):
        u_next = tiled_matmul(r_bf16, i_cur)    # R   @ E_items
        i_next = tiled_matmul(rt_bf16, u_cur)   # R^T @ E_users
        u_acc = u_acc + u_next                  # tiny elementwise; plain JAX
        i_acc = i_acc + i_next
        u_cur, i_cur = u_next, i_next
    scale = 1.0 / float(n_layers + 1)
    return u_acc * scale, i_acc * scale


# ----------------------------------------------------------------------------
# Kernel 2: BPR loss with fused embedding-row gathers (scalar prefetch).
# ----------------------------------------------------------------------------
def _bpr_loss_kernel(u_idx_ref, p_idx_ref, n_idx_ref,   # scalar-prefetch (SMEM)
                     u_ref, p_ref, n_ref,               # gathered (1, 1, D) rows
                     loss_ref,                          # (1, 1) resident output
                     *, reg, batch):
    del u_idx_ref, p_idx_ref, n_idx_ref   # consumed by the index_maps
    b = pl.program_id(0)

    @pl.when(b == 0)
    def _init():
        loss_ref[...] = jnp.zeros_like(loss_ref)

    u = u_ref[0].astype(jnp.float32)   # (1, D)
    p = p_ref[0].astype(jnp.float32)
    n = n_ref[0].astype(jnp.float32)

    pos = jnp.sum(u * p, axis=-1, keepdims=True)   # (1, 1)
    neg = jnp.sum(u * n, axis=-1, keepdims=True)   # (1, 1)
    x = pos - neg
    # numerically-stable log-sigmoid(x) = min(x, 0) - log1p(exp(-|x|))
    logsig = jnp.minimum(x, 0.0) - jnp.log1p(jnp.exp(-jnp.abs(x)))

    contrib = -logsig
    if reg > 0.0:    # static Python branch
        sq = 0.5 * (jnp.sum(u * u, axis=-1, keepdims=True)
                    + jnp.sum(p * p, axis=-1, keepdims=True)
                    + jnp.sum(n * n, axis=-1, keepdims=True))
        contrib = contrib + jnp.float32(reg) * sq
    loss_ref[...] += contrib

    @pl.when(b == batch - 1)
    def _finalize():
        # TODO(synk): (1,1) VMEM output implies one masked partial store at
        # the very end; an SMEM scalar output would avoid it (negligible).
        loss_ref[...] = loss_ref[...] * jnp.float32(1.0 / batch)


def bpr_loss(light_u, light_i, users, pos_items, neg_items, reg):
    batch = users.shape[0]
    n_u, d = light_u.shape
    n_i, _ = light_i.shape
    # Present rows as (N, 1, D) so gathered blocks (1, 1, D) keep the full
    # (sublane, lane) extent in the last two dims.
    lu3 = light_u.reshape(n_u, 1, d)
    li3 = light_i.reshape(n_i, 1, d)

    kernel = functools.partial(_bpr_loss_kernel, reg=float(reg), batch=batch)
    out = pl.pallas_call(
        kernel,
        out_shape=jax.ShapeDtypeStruct((1, 1), jnp.float32),
        grid_spec=pltpu.PrefetchScalarGridSpec(
            num_scalar_prefetch=3,
            grid=(batch,),
            in_specs=[
                pl.BlockSpec((1, 1, d), lambda b, ui, pi, ni: (ui[b], 0, 0)),
                pl.BlockSpec((1, 1, d), lambda b, ui, pi, ni: (pi[b], 0, 0)),
                pl.BlockSpec((1, 1, d), lambda b, ui, pi, ni: (ni[b], 0, 0)),
            ],
            out_specs=pl.BlockSpec((1, 1), lambda b, ui, pi, ni: (0, 0)),
        ),
        compiler_params=pltpu.CompilerParams(
            dimension_semantics=("arbitrary",),   # sequential batch reduction
            vmem_limit_bytes=32 * 1024 * 1024,
        ),
    )(users.astype(jnp.int32), pos_items.astype(jnp.int32),
      neg_items.astype(jnp.int32), lu3, li3, li3)
    return out[0, 0]


# ----------------------------------------------------------------------------
# Full LightGCN forward.
# ----------------------------------------------------------------------------
def lightgcn_forward(user_table, item_table, r_bf16, rt_bf16, users,
                     pos_items, neg_items, n_layers, reg):
    light_u, light_i = lightgcn_propagate(r_bf16, rt_bf16, user_table,
                                          item_table, n_layers)
    return bpr_loss(light_u, light_i, users, pos_items, neg_items, reg)


# ----------------------------------------------------------------------------
# Pure-JAX reference (mirrors the PyTorch module: dense symmetric adjacency).
# ----------------------------------------------------------------------------
def lightgcn_forward_ref(user_table, item_table, r_f32, users, pos_items,
                         neg_items, n_layers, reg):
    n_users = user_table.shape[0]
    n_items = item_table.shape[0]
    n_nodes = n_users + n_items
    adj = jnp.zeros((n_nodes, n_nodes), jnp.float32)
    adj = adj.at[:n_users, n_users:].set(r_f32)
    adj = adj.at[n_users:, :n_users].set(r_f32.T)

    all_emb = jnp.concatenate([user_table, item_table], axis=0)
    embs = [all_emb]
    cur = all_emb
    for _ in range(n_layers):
        cur = adj @ cur
        embs.append(cur)
    light_out = jnp.mean(jnp.stack(embs, axis=1), axis=1)

    u = jnp.take(light_out[:n_users], users, axis=0)
    p = jnp.take(light_out[n_users:], pos_items, axis=0)
    n = jnp.take(light_out[n_users:], neg_items, axis=0)
    pos_scores = jnp.sum(u * p, axis=-1)
    neg_scores = jnp.sum(u * n, axis=-1)
    loss = -jnp.mean(jax.nn.log_sigmoid(pos_scores - neg_scores))
    if reg > 0:
        reg_term = 0.5 * (jnp.sum(u ** 2) + jnp.sum(p ** 2) + jnp.sum(n ** 2)) \
            / float(users.shape[0])
        loss = loss + reg * reg_term
    return loss


if __name__ == "__main__":
    # Small synthetic configuration consistent with the module's __init__,
    # sized so the tiled grid (row tiles x k tiles) is actually exercised.
    n_users, n_items = 256, 384
    emb_dim = 128
    n_layers = 2
    reg = 1e-4
    batch = 8

    key = jax.random.PRNGKey(0)
    k_u, k_i, k_r, k_us, k_pi, k_ni = jax.random.split(key, 6)

    # nn.init.normal_(std=0.1) embedding tables.
    user_table = 0.1 * jax.random.normal(k_u, (n_users, emb_dim), jnp.float32)
    item_table = 0.1 * jax.random.normal(k_i, (n_items, emb_dim), jnp.float32)

    # Bipartite interaction matrix R (n_users x n_items), symmetric
    # degree-normalized:  A = D^{-1/2} [[0, R], [R^T, 0]] D^{-1/2}.
    r = (jax.random.uniform(k_r, (n_users, n_items)) < 0.15).astype(jnp.float32)
    deg_u = jnp.sum(r, axis=1)
    deg_i = jnp.sum(r, axis=0)
    du = jnp.where(deg_u > 0, 1.0 / jnp.sqrt(jnp.maximum(deg_u, 1e-12)), 0.0)
    di = jnp.where(deg_i > 0, 1.0 / jnp.sqrt(jnp.maximum(deg_i, 1e-12)), 0.0)
    r_norm = du[:, None] * r * di[None, :]

    # Adjacency stored on-device in bf16 (halves adjacency HBM traffic, the
    # dominant stream); the reference consumes the same stored values so the
    # tolerance check isolates kernel correctness.
    r_bf16 = r_norm.astype(jnp.bfloat16)
    rt_bf16 = jnp.transpose(r_bf16)
    r_ref_f32 = r_bf16.astype(jnp.float32)

    users = jax.random.randint(k_us, (batch,), 0, n_users, jnp.int32)
    pos_items = jax.random.randint(k_pi, (batch,), 0, n_items, jnp.int32)
    neg_items = jax.random.randint(k_ni, (batch,), 0, n_items, jnp.int32)

    loss = lightgcn_forward(user_table, item_table, r_bf16, rt_bf16, users,
                            pos_items, neg_items, n_layers, reg)
    loss = jax.block_until_ready(loss)

    loss_ref = lightgcn_forward_ref(user_table, item_table, r_ref_f32, users,
                                    pos_items, neg_items, n_layers, reg)
    loss_ref = jax.block_until_ready(loss_ref)

    assert jnp.allclose(loss, loss_ref, rtol=1e-4, atol=1e-4), (loss, loss_ref)
    print("KERNEL_OK")
</pallas_src>

<mosaic_0001>
module attributes {stable_mosaic.version = 11 : i64} {
  func.func @_matmul_kernel(%arg0: i32, %arg1: i32, %arg2: memref<256x128xbf16, #tpu.memory_space<vmem>>, %arg3: memref<384x128xf32, #tpu.memory_space<vmem>>, %arg4: memref<256x128xf32, #tpu.memory_space<vmem>>) attributes {dimension_semantics = [#tpu.dimension_semantics<parallel>, #tpu.dimension_semantics<arbitrary>], iteration_bounds = array<i64: 1, 3>, scalar_prefetch = 0 : i64, scratch_operands = 0 : i64, tpu.core_type = #tpu.core_type<tc>, window_params = [{transform_indices = @transform_0, window_bounds = array<i64: 256, 128>}, {pipeline_mode = #tpu.pipeline_mode<synchronous>, transform_indices = @transform_1, window_bounds = array<i64: 384, 128>}, {transform_indices = @transform_2, window_bounds = array<i64: 256, 128>}]} {
    %c0_i32 = arith.constant 0 : i32
    %0 = arith.cmpi eq, %arg1, %c0_i32 : i32
    %1 = arith.extui %0 : i1 to i32
    %c0_i32_0 = arith.constant 0 : i32
    %2 = arith.cmpi ne, %1, %c0_i32_0 : i32
    scf.if %2 {
      %cst_7 = arith.constant 0.000000e+00 : f32
      %13 = vector.broadcast %cst_7 : f32 to vector<256x128xf32>
      %c0_8 = arith.constant 0 : index
      %c0_9 = arith.constant 0 : index
      %14 = vector.load %arg4[%c0_8, %c0_9] : memref<256x128xf32, #tpu.memory_space<vmem>>, vector<256x128xf32>
      tpu.vector_store %arg4[%c0_8, %c0_9], %13 {strides = array<i32>} : memref<256x128xf32, #tpu.memory_space<vmem>>, vector<256x128xf32>,
    } else {
    }
    %c0 = arith.constant 0 : index
    %c0_1 = arith.constant 0 : index
    %3 = vector.load %arg2[%c0, %c0_1] : memref<256x128xbf16, #tpu.memory_space<vmem>>, vector<256x128xbf16>
    %4 = arith.extf %3 : vector<256x128xbf16> to vector<256x128xf32>
    %c128_i32 = arith.constant 128 : i32
    %5 = arith.muli %arg1, %c128_i32 : i32
    %6 = tpu.assume_multiple %5, 128 : i32
    %7 = arith.index_cast %6 : i32 to index
    %c0_2 = arith.constant 0 : index
    %8 = vector.load %arg3[%7, %c0_2] : memref<384x128xf32, #tpu.memory_space<vmem>>, vector<128x128xf32>
    %c0_3 = arith.constant 0 : index
    %c0_4 = arith.constant 0 : index
    %9 = vector.load %arg4[%c0_3, %c0_4] : memref<256x128xf32, #tpu.memory_space<vmem>>, vector<256x128xf32>
    %cst = arith.constant dense<0.000000e+00> : vector<256x128xf32>
    %10 = tpu.matmul %4, %8, %cst {dimension_numbers = #tpu.dot_dimension_numbers<[1], [0], [0], [1], [0, 0, 1, 1], [], []>} : vector<256x128xf32>, vector<128x128xf32>, vector<256x128xf32> -> vector<256x128xf32>
    %11 = arith.addf %9, %10 : vector<256x128xf32>
    %c0_5 = arith.constant 0 : index
    %c0_6 = arith.constant 0 : index
    %12 = vector.load %arg4[%c0_5, %c0_6] : memref<256x128xf32, #tpu.memory_space<vmem>>, vector<256x128xf32>
    tpu.vector_store %arg4[%c0_5, %c0_6], %11 {strides = array<i32>} : memref<256x128xf32, #tpu.memory_space<vmem>>, vector<256x128xf32>,
    return
  }
  func.func @transform_0(%arg0: i32, %arg1: i32) -> (i32, i32) {
    %c0_i32 = arith.constant 0 : i32
    return %arg0, %arg1 : i32, i32
  }
  func.func @transform_1(%arg0: i32, %arg1: i32) -> (i32, i32) {
    %c0_i32 = arith.constant 0 : i32
    %c0_i32_0 = arith.constant 0 : i32
    %c0_i32_1 = arith.constant 0 : i32
    return %c0_i32, %c0_i32_0 : i32, i32
  }
  func.func @transform_2(%arg0: i32, %arg1: i32) -> (i32, i32) {
    %c0_i32 = arith.constant 0 : i32
    %c0_i32_0 = arith.constant 0 : i32
    return %arg0, %c0_i32 : i32, i32
  }
}

</mosaic_0001>

<llo_original>
// kernel: tpu_custom_call.1
$region0: #{tpu_custom_call.1}
  #allocation0 [shape = 'u32[]', space=smem, size = 0x4, offset = 0x4, fixed_abs, tag = 'smem constant byte address 0x4 - core index']
  #allocation1 [shape = 'u32[144,128]{1,0:T(1,128)}', space=vmem, size = 0x12000, scoped, tag = 'internal scratch']
  %s0 = inlined_call_operand.hbm [shape: bf16[256,384], index: 0, kind: input, shape index: {}]
  %s1 = inlined_call_operand.hbm [shape: f32[384,128], index: 1, kind: input, shape index: {}]
  %s2 = inlined_call_operand.hbm [shape: f32[256,128], index: 2, kind: output, shape index: {}]
  %s3 = sld [smem:[#allocation0]]
  $region53: #{tpu_custom_call.1} parent=0
    _
  %s5 = ssub.s32 1, %s3
  %s6 = scalar_select 0, %s5, %s3
  $region1: #{tpu_custom_call.1} parent=0
    #allocation2 [shape = 'u8[131072]{0}', space=vmem, size = 0x20000, scoped, tag = 'input window, operand 0']
    #allocation3 [shape = 's32[2]{0}', space=sflag, size = 0x8, scoped, tag = 'scoped memory for tpu_custom_call.1']
    #allocation4 [shape = 's32[2]{0}', space=sflag, size = 0x8, scoped, tag = 'scoped memory for tpu_custom_call.1']
    #allocation5 [shape = 'u8[196608]{0}', space=vmem, size = 0x30000, scoped, tag = 'input window, operand 1, single buffered']
    #allocation6 [shape = 's32[1]{0}', space=sflag, size = 0x4, scoped, tag = 'scoped memory for tpu_custom_call.1']
    #allocation7 [shape = 'u8[131072]{0}', space=vmem, size = 0x20000, scoped, tag = 'output window, operand 0, single buffered']
    %7 = vsyncpa [#allocation3], 0
    %s8 = scalar_lea.sflag [#allocation3], 1
    %9 = vsyncpa %s8, 0
    %10 = vsyncpa [#allocation6], 0
    %11 = vsyncpa [#allocation4], 0
    loop: start=0, step=1, limit=5
    $region2: #{tpu_custom_call.1} parent=1 // loop_pre_header
      _
    $region3: #{tpu_custom_call.1} parent=1 // loop_header
      %s13 = sphi 0, %s17
      %p14 = scmp.ge.s32.totalorder %s13, 5
      %s20 = sphi 0, %s32
      %s21 = sphi 0, %s28
      %s22 = sphi 0, %s20
      %s23 = sphi 0, %s21
      %s24 = sphi 0, %s22
      %s25 = sphi 0, %s23
      %s37 = sphi 0, %s39
      %s40 = sphi 0, %s37
      %s41 = sphi 0, %s40
      %s57 = sphi 0, %s41
      %s61 = sphi 0, %s61
      %s63 = sphi 0, %s61
      %s64 = sphi 0, %s63
      %s78 = sphi 0, %s64
      %s84 = sphi 0, %s86
      %s87 = sphi 0, %s84
      %s88 = sphi 0, %s87
      %s104 = sphi 0, %s88
    $region4: #{tpu_custom_call.1} parent=1 // loop_header_branch
      %16 = sbr.rel (%p14) target = $region8
    $region5: #{tpu_custom_call.1} parent=1 // loop_body
      %s18 = ssub.s32 %s13, 1
      %s19 = ssub.s32 %s13, 2
      %s26 = sadd.s32 1, %s21
      %p27 = scmp.ge.s32.totalorder %s26, 3
      %s28 = scalar_select %p27, 0, %s26
      %s29 = sadd.s32 1, %s20
      %s30 = scalar_select %p27, %s29, %s20
      %p31 = scmp.ge.s32.totalorder %s30, 1
      %s32 = scalar_select %p31, 0, %s30
      %s33 = ssub.s32 %s20, %s32
      %s34 = ssub.s32 %s21, %s28
      %s35 = sor.u32 %s33, %s34
      %p36 = scmp.eq.s32.totalorder %s35, 0
      %s38 = sadd.s32 %s37, 1
      %s39 = scalar_select %p36, %s37, %s38
      %p42 = pneg %p36
      %p43 = scmp.eq.s32.totalorder %s13, 2
      %p44 = por %p42, %p43
      %p45 = scmp.ne.s32.totalorder %s37, %s40
      %p46 = scmp.eq.s32.totalorder %s13, 0
      %p47 = por %p45, %p46
      %p48 = scmp.ne.s32.totalorder %s37, %s40
      %p49 = scmp.eq.s32.totalorder %s18, 2
      %p50 = por %p48, %p49
      %p51 = scmp.ne.s32.totalorder %s40, %s41
      %p52 = scmp.eq.s32.totalorder %s18, 0
      %p53 = por %p51, %p52
      %p54 = scmp.ne.s32.totalorder %s40, %s41
      %p55 = scmp.eq.s32.totalorder %s19, 2
      %p56 = por %p54, %p55
      %p58 = scmp.ne.s32.totalorder %s41, %s57
      %p59 = scmp.eq.s32.totalorder %s19, 0
      %p60 = por %p58, %p59
      %s62 = sadd.s32 %s61, 1
      %p65 = scmp.eq.s32.totalorder %s13, 2
      %p66 = scmp.ne.s32.totalorder %s61, %s63
      %p67 = scmp.eq.s32.totalorder %s13, 0
      %p68 = por %p66, %p67
      %p69 = scmp.ne.s32.totalorder %s61, %s63
      %p70 = scmp.eq.s32.totalorder %s18, 2
      %p71 = por %p69, %p70
      %p72 = scmp.ne.s32.totalorder %s63, %s64
      %p73 = scmp.eq.s32.totalorder %s18, 0
      %p74 = por %p72, %p73
      %p75 = scmp.ne.s32.totalorder %s63, %s64
      %p76 = scmp.eq.s32.totalorder %s19, 2
      %p77 = por %p75, %p76
      %p79 = scmp.ne.s32.totalorder %s64, %s78
      %p80 = scmp.eq.s32.totalorder %s19, 0
      %p81 = por %p79, %p80
      %s82 = ssub.s32 %s20, %s32
      %p83 = scmp.eq.s32.totalorder %s82, 0
      %s85 = sadd.s32 %s84, 1
      %s86 = scalar_select %p83, %s84, %s85
      %p89 = pneg %p83
      %p90 = scmp.eq.s32.totalorder %s13, 2
      %p91 = por %p89, %p90
      %p92 = scmp.ne.s32.totalorder %s84, %s87
      %p93 = scmp.eq.s32.totalorder %s13, 0
      %p94 = por %p92, %p93
      %p95 = scmp.ne.s32.totalorder %s84, %s87
      %p96 = scmp.eq.s32.totalorder %s18, 2
      %p97 = por %p95, %p96
      %p98 = scmp.ne.s32.totalorder %s87, %s88
      %p99 = scmp.eq.s32.totalorder %s18, 0
      %p100 = por %p98, %p99
      %p101 = scmp.ne.s32.totalorder %s87, %s88
      %p102 = scmp.eq.s32.totalorder %s19, 2
      %p103 = por %p101, %p102
      %p105 = scmp.ne.s32.totalorder %s88, %s104
      %p106 = scmp.eq.s32.totalorder %s19, 0
      %p107 = por %p105, %p106
      %p108 = scmp.le.s32.totalorder 1, %s13
      %p109 = scmp.lt.s32.totalorder %s13, 4
      %p110 = pnand %p108, %p109
      %p111 = pneg %p110
      // Predicated region
      $region9: #{tpu_custom_call.1} parent=5 // pred_check
        _
      $region10: #{tpu_custom_call.1} parent=5 // pred_check_branch
        %113 = sbr.rel (%p110) target = $region12
      $region11: #{tpu_custom_call.1} parent=5 // pred_region
        %s114 = ssub.s32 %s13, 1
        // Predicated region
        $region13: #{tpu_custom_call.1} parent=11 // pred_check
          %p115 = pneg %p74
        $region14: #{tpu_custom_call.1} parent=11 // pred_check_branch
          %117 = sbr.rel (%p115) target = $region16
        $region15: #{tpu_custom_call.1} parent=11 // pred_region
          %s119 = ssub.s32 6144, 6144
          %120 = vsyncadd [#allocation6], %s119
          %s121 = sshll.u32 [#allocation5], 4
          %s122 = int_to_ptr.vmem [resolvable:$true] %s121
          %127 = dma.hbm_to_vmem [thread:$0]  %s1, 6144, %s122, [#allocation6], 128, 128, 8
        $region16: #{tpu_custom_call.1} parent=11 // pred_fallthru
          _
      $region12: #{tpu_custom_call.1} parent=5 // pred_fallthru
        _
      %p128 = scmp.lt.s32.totalorder %s13, 3
      // Predicated region
      $region17: #{tpu_custom_call.1} parent=5 // pred_check
        %p129 = pneg %p128
      $region18: #{tpu_custom_call.1} parent=5 // pred_check_branch
        %131 = sbr.rel (%p129) target = $region20
      $region19: #{tpu_custom_call.1} parent=5 // pred_region
        // Predicated region
        $region21: #{tpu_custom_call.1} parent=19 // pred_check
          %p132 = pneg %p47
        $region22: #{tpu_custom_call.1} parent=19 // pred_check_branch
          %134 = sbr.rel (%p132) target = $region24
        $region23: #{tpu_custom_call.1} parent=19 // pred_region
          %s135 = sand.u32 %s37, 1
          %s136 = scalar_lea.sflag [#allocation3], %s135
          %s137 = sand.u32 %s37, 1
          %s138 = smul.addr %s137, 128
          %s139 = scalar_lea.vmem [#allocation2], %s138
          %s140 = smul.u32 32, %s20
          %s142 = ssub.s32 2048, 2048
          %143 = vsyncadd %s136, %s142
          %s144 = smul.addr %s140, 3
          %s145 = sadd.s32 %s21, %s144
          %s146 = smul.addr %s145, 64
          %s147 = scalar_lea.hbm %s0, %s146
          %s148 = sshll.u32 %s139, 4
          %s149 = int_to_ptr.vmem [resolvable:$true] %s148
          %154 = dma.hbm_to_vmem [thread:$0]  %s147, 2048, %s149, %s136, 192, 64, 4
        $region24: #{tpu_custom_call.1} parent=19 // pred_fallthru
          _
      $region20: #{tpu_custom_call.1} parent=5 // pred_fallthru
        _
      %p155 = scmp.le.s32.totalorder 1, %s13
      %p156 = scmp.lt.s32.totalorder %s13, 4
      %p157 = pnand %p155, %p156
      %p158 = pneg %p157
      // Predicated region
      $region25: #{tpu_custom_call.1} parent=5 // pred_check
        _
      $region26: #{tpu_custom_call.1} parent=5 // pred_check_branch
        %160 = sbr.rel (%p157) target = $region28
      $region27: #{tpu_custom_call.1} parent=5 // pred_region
        %s161 = ssub.s32 %s13, 1
        %s162 = sand.u32 %s40, 1
        %s163 = scalar_lea.sflag [#allocation3], %s162
        %s164 = sand.u32 %s40, 1
        %s165 = smul.addr %s164, 128
        %s166 = scalar_lea.vmem [#allocation2], %s165
        // Predicated region
        $region29: #{tpu_custom_call.1} parent=27 // pred_check
          %p167 = pneg %p53
        $region30: #{tpu_custom_call.1} parent=27 // pred_check_branch
          %169 = sbr.rel (%p167) target = $region32
        $region31: #{tpu_custom_call.1} parent=27 // pred_region
          %170 = dma.done %s163, 2048
        $region32: #{tpu_custom_call.1} parent=27 // pred_fallthru
          _
        // Predicated region
        $region33: #{tpu_custom_call.1} parent=27 // pred_check
          %p171 = pneg %p74
        $region34: #{tpu_custom_call.1} parent=27 // pred_check_branch
          %173 = sbr.rel (%p171) target = $region36
        $region35: #{tpu_custom_call.1} parent=27 // pred_region
          %174 = dma.done [#allocation6], 6144
        $region36: #{tpu_custom_call.1} parent=27 // pred_fallthru
          _
        %s175 = sand.u32 %s40, 1
        %s176 = scalar_lea.sflag [#allocation3], %s175
        %s177 = sand.u32 %s40, 1
        %s178 = smul.addr %s177, 128
        %s179 = scalar_lea.vmem [#allocation2], %s178
        %p180 = pneg %p53
        %p181 = pneg %p50
        %p182 = pneg %p74
        %p183 = pneg %p71
        %p184 = pneg %p100
        %p185 = pneg %p97
        %s186 = smul.u32 32, %s22
        %s187 = smul.u32 32, %s22
        %p188 = scmp.eq.s32.totalorder %s23, 0
        // Predicated region
        $region37: #{tpu_custom_call.1} parent=27 // pred_check
          %p189 = pneg %p188
        $region38: #{tpu_custom_call.1} parent=27 // pred_check_branch
          %191 = sbr.rel (%p189) target = $region40
        $region39: #{tpu_custom_call.1} parent=27 // pred_region
          %192 = vst [vmem:[#allocation7] sm:$0xff] 0.0
          %193 = vst [vmem:[#allocation7 + $0x8] sm:$0xff] 0.0
          %194 = vst [vmem:[#allocation7 + $0x10] sm:$0xff] 0.0
          %195 = vst [vmem:[#allocation7 + $0x18] sm:$0xff] 0.0
          %196 = vst [vmem:[#allocation7 + $0x20] sm:$0xff] 0.0
          %197 = vst [vmem:[#allocation7 + $0x28] sm:$0xff] 0.0
          %198 = vst [vmem:[#allocation7 + $0x30] sm:$0xff] 0.0
          %199 = vst [vmem:[#allocation7 + $0x38] sm:$0xff] 0.0
          %200 = vst [vmem:[#allocation7 + $0x40] sm:$0xff] 0.0
          %201 = vst [vmem:[#allocation7 + $0x48] sm:$0xff] 0.0
          %202 = vst [vmem:[#allocation7 + $0x50] sm:$0xff] 0.0
          %203 = vst [vmem:[#allocation7 + $0x58] sm:$0xff] 0.0
          %204 = vst [vmem:[#allocation7 + $0x60] sm:$0xff] 0.0
          %205 = vst [vmem:[#allocation7 + $0x68] sm:$0xff] 0.0
          %206 = vst [vmem:[#allocation7 + $0x70] sm:$0xff] 0.0
          %207 = vst [vmem:[#allocation7 + $0x78] sm:$0xff] 0.0
          %208 = vst [vmem:[#allocation7 + $0x80] sm:$0xff] 0.0
          %209 = vst [vmem:[#allocation7 + $0x88] sm:$0xff] 0.0
          %210 = vst [vmem:[#allocation7 + $0x90] sm:$0xff] 0.0
          %211 = vst [vmem:[#allocation7 + $0x98] sm:$0xff] 0.0
          %212 = vst [vmem:[#allocation7 + $0xa0] sm:$0xff] 0.0
          %213 = vst [vmem:[#allocation7 + $0xa8] sm:$0xff] 0.0
          %214 = vst [vmem:[#allocation7 + $0xb0] sm:$0xff] 0.0
          %215 = vst [vmem:[#allocation7 + $0xb8] sm:$0xff] 0.0
          %216 = vst [vmem:[#allocation7 + $0xc0] sm:$0xff] 0.0
          %217 = vst [vmem:[#allocation7 + $0xc8] sm:$0xff] 0.0
          %218 = vst [vmem:[#allocation7 + $0xd0] sm:$0xff] 0.0
          %219 = vst [vmem:[#allocation7 + $0xd8] sm:$0xff] 0.0
          %220 = vst [vmem:[#allocation7 + $0xe0] sm:$0xff] 0.0
          %221 = vst [vmem:[#allocation7 + $0xe8] sm:$0xff] 0.0
          %222 = vst [vmem:[#allocation7 + $0xf0] sm:$0xff] 0.0
          %223 = vst [vmem:[#allocation7 + $0xf8] sm:$0xff] 0.0
        $region40: #{tpu_custom_call.1} parent=27 // pred_fallthru
          _
        %v224 = vld [vmem:[%s166] sm:$0xf]
        %v225 = vld [vmem:[%s166 + $0x4] sm:$0xf]
        %v226 = vld [vmem:[%s166 + $0x8] sm:$0xf]
        %v227 = vld [vmem:[%s166 + $0xc] sm:$0xf]
        %v228 = vld [vmem:[%s166 + $0x10] sm:$0xf]
        %v229 = vld [vmem:[%s166 + $0x14] sm:$0xf]
        %v230 = vld [vmem:[%s166 + $0x18] sm:$0xf]
        %v231 = vld [vmem:[%s166 + $0x1c] sm:$0xf]
        %v232 = vld [vmem:[%s166 + $0x20] sm:$0xf]
        %v233 = vld [vmem:[%s166 + $0x24] sm:$0xf]
        %v234 = vld [vmem:[%s166 + $0x28] sm:$0xf]
        %v235 = vld [vmem:[%s166 + $0x2c] sm:$0xf]
        %v236 = vld [vmem:[%s166 + $0x30] sm:$0xf]
        %v237 = vld [vmem:[%s166 + $0x34] sm:$0xf]
        %v238 = vld [vmem:[%s166 + $0x38] sm:$0xf]
        %v239 = vld [vmem:[%s166 + $0x3c] sm:$0xf]
        %v240 = vld [vmem:[%s166 + $0x40] sm:$0xf]
        %v241 = vld [vmem:[%s166 + $0x44] sm:$0xf]
        %v242 = vld [vmem:[%s166 + $0x48] sm:$0xf]
        %v243 = vld [vmem:[%s166 + $0x4c] sm:$0xf]
        %v244 = vld [vmem:[%s166 + $0x50] sm:$0xf]
        %v245 = vld [vmem:[%s166 + $0x54] sm:$0xf]
        %v246 = vld [vmem:[%s166 + $0x58] sm:$0xf]
        %v247 = vld [vmem:[%s166 + $0x5c] sm:$0xf]
        %v248 = vld [vmem:[%s166 + $0x60] sm:$0xf]
        %v249 = vld [vmem:[%s166 + $0x64] sm:$0xf]
        %v250 = vld [vmem:[%s166 + $0x68] sm:$0xf]
        %v251 = vld [vmem:[%s166 + $0x6c] sm:$0xf]
        %v252 = vld [vmem:[%s166 + $0x70] sm:$0xf]
        %v253 = vld [vmem:[%s166 + $0x74] sm:$0xf]
        %v254 = vld [vmem:[%s166 + $0x78] sm:$0xf]
        %v255 = vld [vmem:[%s166 + $0x7c] sm:$0xf]
        %v256 = vunpack.c.l.bf16 %v224
        %v257 = vunpack.c.l.bf16 %v225
        %v258 = vunpack.c.l.bf16 %v226
        %v259 = vunpack.c.l.bf16 %v227
        %v260 = vunpack.c.l.bf16 %v228
        %v261 = vunpack.c.l.bf16 %v229
        %v262 = vunpack.c.l.bf16 %v230
        %v263 = vunpack.c.l.bf16 %v231
        %v264 = vunpack.c.l.bf16 %v232
        %v265 = vunpack.c.l.bf16 %v233
        %v266 = vunpack.c.l.bf16 %v234
        %v267 = vunpack.c.l.bf16 %v235
        %v268 = vunpack.c.l.bf16 %v236
        %v269 = vunpack.c.l.bf16 %v237
        %v270 = vunpack.c.l.bf16 %v238
        %v271 = vunpack.c.l.bf16 %v239
        %v272 = vunpack.c.l.bf16 %v240
        %v273 = vunpack.c.l.bf16 %v241
        %v274 = vunpack.c.l.bf16 %v242
        %v275 = vunpack.c.l.bf16 %v243
        %v276 = vunpack.c.l.bf16 %v244
        %v277 = vunpack.c.l.bf16 %v245
        %v278 = vunpack.c.l.bf16 %v246
        %v279 = vunpack.c.l.bf16 %v247
        %v280 = vunpack.c.l.bf16 %v248
        %v281 = vunpack.c.l.bf16 %v249
        %v282 = vunpack.c.l.bf16 %v250
        %v283 = vunpack.c.l.bf16 %v251
        %v284 = vunpack.c.l.bf16 %v252
        %v285 = vunpack.c.l.bf16 %v253
        %v286 = vunpack.c.l.bf16 %v254
        %v287 = vunpack.c.l.bf16 %v255
        %s288 = smul.u32 %s23, 128
        %s289 = scalar_lea.vmem [#allocation5], %s288
        %v290 = vld [vmem:[%s289] sm:$0xff]
        %v291 = vld [vmem:[%s289 + $0x8] sm:$0xff]
        %v292 = vld [vmem:[%s289 + $0x10] sm:$0xff]
        %v293 = vld [vmem:[%s289 + $0x18] sm:$0xff]
        %v294 = vld [vmem:[%s289 + $0x20] sm:$0xff]
        %v295 = vld [vmem:[%s289 + $0x28] sm:$0xff]
        %v296 = vld [vmem:[%s289 + $0x30] sm:$0xff]
        %v297 = vld [vmem:[%s289 + $0x38] sm:$0xff]
        %v298 = vld [vmem:[%s289 + $0x40] sm:$0xff]
        %v299 = vld [vmem:[%s289 + $0x48] sm:$0xff]
        %v300 = vld [vmem:[%s289 + $0x50] sm:$0xff]
        %v301 = vld [vmem:[%s289 + $0x58] sm:$0xff]
        %v302 = vld [vmem:[%s289 + $0x60] sm:$0xff]
        %v303 = vld [vmem:[%s289 + $0x68] sm:$0xff]
        %v304 = vld [vmem:[%s289 + $0x70] sm:$0xff]
        %v305 = vld [vmem:[%s289 + $0x78] sm:$0xff]
        %v306 = vld [vmem:[#allocation7] sm:$0xff]
        %v307 = vld [vmem:[#allocation7 + $0x8] sm:$0xff]
        %v308 = vld [vmem:[#allocation7 + $0x10] sm:$0xff]
        %v309 = vld [vmem:[#allocation7 + $0x18] sm:$0xff]
        %v310 = vld [vmem:[#allocation7 + $0x20] sm:$0xff]
        %v311 = vld [vmem:[#allocation7 + $0x28] sm:$0xff]
        %v312 = vld [vmem:[#allocation7 + $0x30] sm:$0xff]
        %v313 = vld [vmem:[#allocation7 + $0x38] sm:$0xff]
        %v314 = vld [vmem:[#allocation7 + $0x40] sm:$0xff]
        %v315 = vld [vmem:[#allocation7 + $0x48] sm:$0xff]
        %v316 = vld [vmem:[#allocation7 + $0x50] sm:$0xff]
        %v317 = vld [vmem:[#allocation7 + $0x58] sm:$0xff]
        %v318 = vld [vmem:[#allocation7 + $0x60] sm:$0xff]
        %v319 = vld [vmem:[#allocation7 + $0x68] sm:$0xff]
        %v320 = vld [vmem:[#allocation7 + $0x70] sm:$0xff]
        %v321 = vld [vmem:[#allocation7 + $0x78] sm:$0xff]
        %v322 = vld [vmem:[#allocation7 + $0x80] sm:$0xff]
        %v323 = vld [vmem:[#allocation7 + $0x88] sm:$0xff]
        %v324 = vld [vmem:[#allocation7 + $0x90] sm:$0xff]
        %v325 = vld [vmem:[#allocation7 + $0x98] sm:$0xff]
        %v326 = vld [vmem:[#allocation7 + $0xa0] sm:$0xff]
        %v327 = vld [vmem:[#allocation7 + $0xa8] sm:$0xff]
        %v328 = vld [vmem:[#allocation7 + $0xb0] sm:$0xff]
        %v329 = vld [vmem:[#allocation7 + $0xb8] sm:$0xff]
        %v330 = vld [vmem:[#allocation7 + $0xc0] sm:$0xff]
        %v331 = vld [vmem:[#allocation7 + $0xc8] sm:$0xff]
        %v332 = vld [vmem:[#allocation7 + $0xd0] sm:$0xff]
        %v333 = vld [vmem:[#allocation7 + $0xd8] sm:$0xff]
        %v334 = vld [vmem:[#allocation7 + $0xe0] sm:$0xff]
        %v335 = vld [vmem:[#allocation7 + $0xe8] sm:$0xff]
        %v336 = vld [vmem:[#allocation7 + $0xf0] sm:$0xff]
        %v337 = vld [vmem:[#allocation7 + $0xf8] sm:$0xff]
        %338 = vmatprep.subr.mxu0 0.0
        %339 = vmatpush1.msra.mxu0 %v305
        %340 = vmatprep.subr.mxu0 0.0
        %341 = vmatpush1.msra.mxu0 %v304
        %342 = vmatprep.subr.mxu0 0.0
        %343 = vmatpush1.msra.mxu0 %v303
        %344 = vmatprep.subr.mxu0 0.0
        %345 = vmatpush1.msra.mxu0 %v302
        %346 = vmatprep.subr.mxu0 0.0
        %347 = vmatpush1.msra.mxu0 %v301
        %348 = vmatprep.subr.mxu0 0.0
        %349 = vmatpush1.msra.mxu0 %v300
        %350 = vmatprep.subr.mxu0 0.0
        %351 = vmatpush1.msra.mxu0 %v299
        %352 = vmatprep.subr.mxu0 0.0
        %353 = vmatpush1.msra.mxu0 %v298
        %354 = vmatprep.subr.mxu0 0.0
        %355 = vmatpush1.msra.mxu0 %v297
        %356 = vmatprep.subr.mxu0 0.0
        %357 = vmatpush1.msra.mxu0 %v296
        %358 = vmatprep.subr.mxu0 0.0
        %359 = vmatpush1.msra.mxu0 %v295
        %360 = vmatprep.subr.mxu0 0.0
        %361 = vmatpush1.msra.mxu0 %v294
        %362 = vmatprep.subr.mxu0 0.0
        %363 = vmatpush1.msra.mxu0 %v293
        %364 = vmatprep.subr.mxu0 0.0
        %365 = vmatpush1.msra.mxu0 %v292
        %366 = vmatprep.subr.mxu0 0.0
        %367 = vmatpush1.msra.mxu0 %v291
        %368 = vmatprep.subr.mxu0 0.0
        %369 = vmatpush1.msra.mxu0 %v290
        %370 = vmatprep.subr.mxu0 0.0
        %371 = vmatpush2.msra.mxu0 0.0
        %372 = vmatprep.subr.mxu0 0.0
        %373 = vmatpush2.msra.mxu0 0.0
        %374 = vmatprep.subr.mxu0 0.0
        %375 = vmatpush2.msra.mxu0 0.0
        %376 = vmatprep.subr.mxu0 0.0
        %377 = vmatpush2.msra.mxu0 0.0
        %378 = vmatprep.subr.mxu0 0.0
        %379 = vmatpush2.msra.mxu0 0.0
        %380 = vmatprep.subr.mxu0 0.0
        %381 = vmatpush2.msra.mxu0 0.0
        %382 = vmatprep.subr.mxu0 0.0
        %383 = vmatpush2.msra.mxu0 0.0
        %384 = vmatprep.subr.mxu0 0.0
        %385 = vmatpush2.msra.mxu0 0.0
        %386 = vmatprep.subr.mxu0 0.0
        %387 = vmatpush2.msra.mxu0 0.0
        %388 = vmatprep.subr.mxu0 0.0
        %389 = vmatpush2.msra.mxu0 0.0
        %390 = vmatprep.subr.mxu0 0.0
        %391 = vmatpush2.msra.mxu0 0.0
        %392 = vmatprep.subr.mxu0 0.0
        %393 = vmatpush2.msra.mxu0 0.0
        %394 = vmatprep.subr.mxu0 0.0
        %395 = vmatpush2.msra.mxu0 0.0
        %396 = vmatprep.subr.mxu0 0.0
        %397 = vmatpush2.msra.mxu0 0.0
        %398 = vmatprep.subr.mxu0 0.0
        %399 = vmatpush2.msra.mxu0 0.0
        %400 = vmatprep.subr.mxu0 0.0
        %401 = vmatpush2.msra.mxu0 0.0
        %402 = vmatprep.mubr.f32.mxu0 0.0
        %403 = vmatmul.mubr.f32.gmra.mxu0 %v256
        %v404 = vpop.f32.mrf.mxu0
        %v405 = vadd.f32 0.0, %v404
        %v406 = vpop.f32.mrf.mxu0
        %407 = vmatprep.mubr.f32.mxu0 0.0
        %408 = vmatmul.mubr.f32.gmra.mxu0 %v257
        %v409 = vpop.f32.mrf.mxu0
        %v410 = vadd.f32 0.0, %v409
        %v411 = vpop.f32.mrf.mxu0
        %412 = vmatprep.mubr.f32.mxu0 0.0
        %413 = vmatmul.mubr.f32.gmra.mxu0 %v258
        %v414 = vpop.f32.mrf.mxu0
        %v415 = vadd.f32 0.0, %v414
        %v416 = vpop.f32.mrf.mxu0
        %417 = vmatprep.mubr.f32.mxu0 0.0
        %418 = vmatmul.mubr.f32.gmra.mxu0 %v259
        %v419 = vpop.f32.mrf.mxu0
        %v420 = vadd.f32 0.0, %v419
        %v421 = vpop.f32.mrf.mxu0
        %422 = vmatprep.mubr.f32.mxu0 0.0
        %423 = vmatmul.mubr.f32.gmra.mxu0 %v260
        %v424 = vpop.f32.mrf.mxu0
        %v425 = vadd.f32 0.0, %v424
        %v426 = vpop.f32.mrf.mxu0
        %427 = vmatprep.mubr.f32.mxu0 0.0
        %428 = vmatmul.mubr.f32.gmra.mxu0 %v261
        %v429 = vpop.f32.mrf.mxu0
        %v430 = vadd.f32 0.0, %v429
        %v431 = vpop.f32.mrf.mxu0
        %432 = vmatprep.mubr.f32.mxu0 0.0
        %433 = vmatmul.mubr.f32.gmra.mxu0 %v262
        %v434 = vpop.f32.mrf.mxu0
        %v435 = vadd.f32 0.0, %v434
        %v436 = vpop.f32.mrf.mxu0
        %437 = vmatprep.mubr.f32.mxu0 0.0
        %438 = vmatmul.mubr.f32.gmra.mxu0 %v263
        %v439 = vpop.f32.mrf.mxu0
        %v440 = vadd.f32 0.0, %v439
        %v441 = vpop.f32.mrf.mxu0
        %442 = vmatprep.mubr.f32.mxu0 0.0
        %443 = vmatmul.mubr.f32.gmra.mxu0 %v264
        %v444 = vpop.f32.mrf.mxu0
        %v445 = vadd.f32 0.0, %v444
        %v446 = vpop.f32.mrf.mxu0
        %447 = vmatprep.mubr.f32.mxu0 0.0
        %448 = vmatmul.mubr.f32.gmra.mxu0 %v265
        %v449 = vpop.f32.mrf.mxu0
        %v450 = vadd.f32 0.0, %v449
        %v451 = vpop.f32.mrf.mxu0
        %452 = vmatprep.mubr.f32.mxu0 0.0
        %453 = vmatmul.mubr.f32.gmra.mxu0 %v266
        %v454 = vpop.f32.mrf.mxu0
        %v455 = vadd.f32 0.0, %v454
        %v456 = vpop.f32.mrf.mxu0
        %457 = vmatprep.mubr.f32.mxu0 0.0
        %458 = vmatmul.mubr.f32.gmra.mxu0 %v267
        %v459 = vpop.f32.mrf.mxu0
        %v460 = vadd.f32 0.0, %v459
        %v461 = vpop.f32.mrf.mxu0
        %462 = vmatprep.mubr.f32.mxu0 0.0
        %463 = vmatmul.mubr.f32.gmra.mxu0 %v268
        %v464 = vpop.f32.mrf.mxu0
        %v465 = vadd.f32 0.0, %v464
        %v466 = vpop.f32.mrf.mxu0
        %467 = vmatprep.mubr.f32.mxu0 0.0
        %468 = vmatmul.mubr.f32.gmra.mxu0 %v269
        %v469 = vpop.f32.mrf.mxu0
        %v470 = vadd.f32 0.0, %v469
        %v471 = vpop.f32.mrf.mxu0
        %472 = vmatprep.mubr.f32.mxu0 0.0
        %473 = vmatmul.mubr.f32.gmra.mxu0 %v270
        %v474 = vpop.f32.mrf.mxu0
        %v475 = vadd.f32 0.0, %v474
        %v476 = vpop.f32.mrf.mxu0
        %477 = vmatprep.mubr.f32.mxu0 0.0
        %478 = vmatmul.mubr.f32.gmra.mxu0 %v271
        %v479 = vpop.f32.mrf.mxu0
        %v480 = vadd.f32 0.0, %v479
        %v481 = vpop.f32.mrf.mxu0
        %482 = vmatprep.mubr.f32.mxu0 0.0
        %483 = vmatmul.mubr.f32.gmra.mxu0 %v272
        %v484 = vpop.f32.mrf.mxu0
        %v485 = vadd.f32 0.0, %v484
        %v486 = vpop.f32.mrf.mxu0
        %487 = vmatprep.mubr.f32.mxu0 0.0
        %488 = vmatmul.mubr.f32.gmra.mxu0 %v273
        %v489 = vpop.f32.mrf.mxu0
        %v490 = vadd.f32 0.0, %v489
        %v491 = vpop.f32.mrf.mxu0
        %492 = vmatprep.mubr.f32.mxu0 0.0
        %493 = vmatmul.mubr.f32.gmra.mxu0 %v274
        %v494 = vpop.f32.mrf.mxu0
        %v495 = vadd.f32 0.0, %v494
        %v496 = vpop.f32.mrf.mxu0
        %497 = vmatprep.mubr.f32.mxu0 0.0
        %498 = vmatmul.mubr.f32.gmra.mxu0 %v275
        %v499 = vpop.f32.mrf.mxu0
        %v500 = vadd.f32 0.0, %v499
        %v501 = vpop.f32.mrf.mxu0
        %502 = vmatprep.mubr.f32.mxu0 0.0
        %503 = vmatmul.mubr.f32.gmra.mxu0 %v276
        %v504 = vpop.f32.mrf.mxu0
        %v505 = vadd.f32 0.0, %v504
        %v506 = vpop.f32.mrf.mxu0
        %507 = vmatprep.mubr.f32.mxu0 0.0
        %508 = vmatmul.mubr.f32.gmra.mxu0 %v277
        %v509 = vpop.f32.mrf.mxu0
        %v510 = vadd.f32 0.0, %v509
        %v511 = vpop.f32.mrf.mxu0
        %512 = vmatprep.mubr.f32.mxu0 0.0
        %513 = vmatmul.mubr.f32.gmra.mxu0 %v278
        %v514 = vpop.f32.mrf.mxu0
        %v515 = vadd.f32 0.0, %v514
        %v516 = vpop.f32.mrf.mxu0
        %517 = vmatprep.mubr.f32.mxu0 0.0
        %518 = vmatmul.mubr.f32.gmra.mxu0 %v279
        %v519 = vpop.f32.mrf.mxu0
        %v520 = vadd.f32 0.0, %v519
        %v521 = vpop.f32.mrf.mxu0
        %522 = vmatprep.mubr.f32.mxu0 0.0
        %523 = vmatmul.mubr.f32.gmra.mxu0 %v280
        %v524 = vpop.f32.mrf.mxu0
        %v525 = vadd.f32 0.0, %v524
        %v526 = vpop.f32.mrf.mxu0
        %527 = vmatprep.mubr.f32.mxu0 0.0
        %528 = vmatmul.mubr.f32.gmra.mxu0 %v281
        %v529 = vpop.f32.mrf.mxu0
        %v530 = vadd.f32 0.0, %v529
        %v531 = vpop.f32.mrf.mxu0
        %532 = vmatprep.mubr.f32.mxu0 0.0
        %533 = vmatmul.mubr.f32.gmra.mxu0 %v282
        %v534 = vpop.f32.mrf.mxu0
        %v535 = vadd.f32 0.0, %v534
        %v536 = vpop.f32.mrf.mxu0
        %537 = vmatprep.mubr.f32.mxu0 0.0
        %538 = vmatmul.mubr.f32.gmra.mxu0 %v283
        %v539 = vpop.f32.mrf.mxu0
        %v540 = vadd.f32 0.0, %v539
        %v541 = vpop.f32.mrf.mxu0
        %542 = vmatprep.mubr.f32.mxu0 0.0
        %543 = vmatmul.mubr.f32.gmra.mxu0 %v284
        %v544 = vpop.f32.mrf.mxu0
        %v545 = vadd.f32 0.0, %v544
        %v546 = vpop.f32.mrf.mxu0
        %547 = vmatprep.mubr.f32.mxu0 0.0
        %548 = vmatmul.mubr.f32.gmra.mxu0 %v285
        %v549 = vpop.f32.mrf.mxu0
        %v550 = vadd.f32 0.0, %v549
        %v551 = vpop.f32.mrf.mxu0
        %552 = vmatprep.mubr.f32.mxu0 0.0
        %553 = vmatmul.mubr.f32.gmra.mxu0 %v286
        %v554 = vpop.f32.mrf.mxu0
        %v555 = vadd.f32 0.0, %v554
        %v556 = vpop.f32.mrf.mxu0
        %557 = vmatprep.mubr.f32.mxu0 0.0
        %558 = vmatmul.mubr.f32.gmra.mxu0 %v287
        %v559 = vpop.f32.mrf.mxu0
        %v560 = vadd.f32 0.0, %v559
        %v561 = vpop.f32.mrf.mxu0
        %562 = vdwg.mxu0
        %v563 = vadd.f32 %v306, %v405
        %v564 = vadd.f32 %v307, %v410
        %v565 = vadd.f32 %v308, %v415
        %v566 = vadd.f32 %v309, %v420
        %v567 = vadd.f32 %v310, %v425
        %v568 = vadd.f32 %v311, %v430
        %v569 = vadd.f32 %v312, %v435
        %v570 = vadd.f32 %v313, %v440
        %v571 = vadd.f32 %v314, %v445
        %v572 = vadd.f32 %v315, %v450
        %v573 = vadd.f32 %v316, %v455
        %v574 = vadd.f32 %v317, %v460
        %v575 = vadd.f32 %v318, %v465
        %v576 = vadd.f32 %v319, %v470
        %v577 = vadd.f32 %v320, %v475
        %v578 = vadd.f32 %v321, %v480
        %v579 = vadd.f32 %v322, %v485
        %v580 = vadd.f32 %v323, %v490
        %v581 = vadd.f32 %v324, %v495
        %v582 = vadd.f32 %v325, %v500
        %v583 = vadd.f32 %v326, %v505
        %v584 = vadd.f32 %v327, %v510
        %v585 = vadd.f32 %v328, %v515
        %v586 = vadd.f32 %v329, %v520
        %v587 = vadd.f32 %v330, %v525
        %v588 = vadd.f32 %v331, %v530
        %v589 = vadd.f32 %v332, %v535
        %v590 = vadd.f32 %v333, %v540
        %v591 = vadd.f32 %v334, %v545
        %v592 = vadd.f32 %v335, %v550
        %v593 = vadd.f32 %v336, %v555
        %v594 = vadd.f32 %v337, %v560
        %595 = vst [vmem:[#allocation7] sm:$0xff] %v563
        %596 = vst [vmem:[#allocation7 + $0x8] sm:$0xff] %v564
        %597 = vst [vmem:[#allocation7 + $0x10] sm:$0xff] %v565
        %598 = vst [vmem:[#allocation7 + $0x18] sm:$0xff] %v566
        %599 = vst [vmem:[#allocation7 + $0x20] sm:$0xff] %v567
        %600 = vst [vmem:[#allocation7 + $0x28] sm:$0xff] %v568
        %601 = vst [vmem:[#allocation7 + $0x30] sm:$0xff] %v569
        %602 = vst [vmem:[#allocation7 + $0x38] sm:$0xff] %v570
        %603 = vst [vmem:[#allocation7 + $0x40] sm:$0xff] %v571
        %604 = vst [vmem:[#allocation7 + $0x48] sm:$0xff] %v572
        %605 = vst [vmem:[#allocation7 + $0x50] sm:$0xff] %v573
        %606 = vst [vmem:[#allocation7 + $0x58] sm:$0xff] %v574
        %607 = vst [vmem:[#allocation7 + $0x60] sm:$0xff] %v575
        %608 = vst [vmem:[#allocation7 + $0x68] sm:$0xff] %v576
        %609 = vst [vmem:[#allocation7 + $0x70] sm:$0xff] %v577
        %610 = vst [vmem:[#allocation7 + $0x78] sm:$0xff] %v578
        %611 = vst [vmem:[#allocation7 + $0x80] sm:$0xff] %v579
        %612 = vst [vmem:[#allocation7 + $0x88] sm:$0xff] %v580
        %613 = vst [vmem:[#allocation7 + $0x90] sm:$0xff] %v581
        %614 = vst [vmem:[#allocation7 + $0x98] sm:$0xff] %v582
        %615 = vst [vmem:[#allocation7 + $0xa0] sm:$0xff] %v583
        %616 = vst [vmem:[#allocation7 + $0xa8] sm:$0xff] %v584
        %617 = vst [vmem:[#allocation7 + $0xb0] sm:$0xff] %v585
        %618 = vst [vmem:[#allocation7 + $0xb8] sm:$0xff] %v586
        %619 = vst [vmem:[#allocation7 + $0xc0] sm:$0xff] %v587
        %620 = vst [vmem:[#allocation7 + $0xc8] sm:$0xff] %v588
        %621 = vst [vmem:[#allocation7 + $0xd0] sm:$0xff] %v589
        %622 = vst [vmem:[#allocation7 + $0xd8] sm:$0xff] %v590
        %623 = vst [vmem:[#allocation7 + $0xe0] sm:$0xff] %v591
        %624 = vst [vmem:[#allocation7 + $0xe8] sm:$0xff] %v592
        %625 = vst [vmem:[#allocation7 + $0xf0] sm:$0xff] %v593
        %626 = vst [vmem:[#allocation7 + $0xf8] sm:$0xff] %v594
        // Predicated region
        $region41: #{tpu_custom_call.1} parent=27 // pred_check
          %p627 = pneg %p97
        $region42: #{tpu_custom_call.1} parent=27 // pred_check_branch
          %629 = sbr.rel (%p627) target = $region44
        $region43: #{tpu_custom_call.1} parent=27 // pred_region
          %s630 = smul.u32 32, %s22
          %s632 = ssub.s32 4096, 4096
          %633 = vsyncadd [#allocation4], %s632
          %s634 = smul.addr %s630, 128
          %s635 = scalar_lea.hbm %s2, %s634
          %s636 = sshll.u32 [#allocation7], 4
          %s637 = int_to_ptr.vmem [resolvable:$true] %s636
          %642 = dma.vmem_to_hbm [thread:$0]  %s637, 4096, %s635, [#allocation4], 128, 128, 8
        $region44: #{tpu_custom_call.1} parent=27 // pred_fallthru
          _
        // Predicated region
        $region45: #{tpu_custom_call.1} parent=27 // pred_check
          %p643 = pneg %p97
        $region46: #{tpu_custom_call.1} parent=27 // pred_check_branch
          %645 = sbr.rel (%p643) target = $region48
        $region47: #{tpu_custom_call.1} parent=27 // pred_region
          %646 = dma.done [#allocation4], 4096
        $region48: #{tpu_custom_call.1} parent=27 // pred_fallthru
          _
      $region28: #{tpu_custom_call.1} parent=5 // pred_fallthru
        _
      %p647 = scmp.le.s32.totalorder 2, %s13
      // Predicated region
      $region49: #{tpu_custom_call.1} parent=5 // pred_check
        %p648 = pneg %p647
      $region50: #{tpu_custom_call.1} parent=5 // pred_check_branch
        %650 = sbr.rel (%p648) target = $region52
      $region51: #{tpu_custom_call.1} parent=5 // pred_region
        %s651 = ssub.s32 %s13, 2
      $region52: #{tpu_custom_call.1} parent=5 // pred_fallthru
        _
    $region6: #{tpu_custom_call.1} parent=1 // loop_footer
      %s17 = sadd.s32 1, %s13
    $region7: #{tpu_custom_call.1} parent=1 // loop_footer_branch
      %12 = sbr.rel target = $region3
    $region8: #{tpu_custom_call.1} parent=1 // loop_exit
      _
    %652 = vsyncpa [#allocation3], 1
    %s653 = scalar_lea.sflag [#allocation3], 1
    %654 = vsyncpa %s653, 1
    %655 = vsyncpa [#allocation6], 1
    %656 = vsyncpa [#allocation4], 1
    %s657 = scalar_lea.sflag [#allocation4], 1
    %658 = vsyncpa %s657, 1

</llo_original>
